<compile_context>
chip_gen: v7x
topology: tpu7x:2x2x1
jax: 0.10.0
libtpu: 0.0.40
codegen_flags: <defaults>
</compile_context>

<pallas_src>
import functools
import math

import jax
import jax.numpy as jnp
from jax import lax
from jax.experimental import pallas as pl
from jax.experimental.pallas import tpu as pltpu


def _mtl_sum_kernel(ab_ref, x_ref, t_ref, out_ref, acc_ref, *,
                    rows_total, tile_rows, acc_rows, blocks_per_split,
                    any_partial):
    c = pl.program_id(0)      # split index (maps to a TensorCore on v7x)
    j = pl.program_id(1)      # row-block index within this split

    @pl.when(j == 0)
    def _init():
        acc_ref[...] = jnp.zeros_like(acc_ref)

    x = x_ref[...].astype(jnp.float32)        # (tile_rows, W)
    t = t_ref[...].astype(jnp.float32)        # (tile_rows, W)
    ab = ab_ref[...]                          # (2, W) f32 constants
    a = ab[0:1, :]                            # exp(-2*log_vars), per column
    b = ab[1:2, :]                            # a * (pos_weight - 1)

    # Numerically stable BCE-with-logits core:
    #   softplus(-x) = log1p(exp(-|x|)) + max(-x, 0)
    sp = jnp.log1p(jnp.exp(-jnp.abs(x))) + jnp.maximum(-x, 0.0)
    # weighted = exp(-2*lv) * [(1-t)*x + (1 + (pw-1)*t) * softplus(-x)]
    #          = a*(1-t)*x + (a + b*t)*sp           (A/B folding)
    weighted = (a * (1.0 - t)) * x + (a + b * t) * sp

    def _fold(w):
        # Per-step partial reduce into the small (acc_rows, W) accumulator:
        # leading-dim split on 8-row (native sublane tile) boundaries -> pure
        # VPU adds, no full-tile read-modify-write of a big accumulator.
        if tile_rows == acc_rows:
            return w
        return w.reshape(tile_rows // acc_rows, acc_rows, w.shape[-1]).sum(axis=0)

    row_start = (c * blocks_per_split + j) * tile_rows

    if any_partial:
        # Only the (at most one) block that overhangs the array pays for the
        # row mask; everything else takes the unmasked branch. Fully-OOB
        # "duplicate" steps (clamped index_map) mask to all-zero as well.
        is_full = row_start + tile_rows <= rows_total

        @pl.when(is_full)
        def _acc_full():
            acc_ref[...] += _fold(weighted)

        @pl.when(jnp.logical_not(is_full))
        def _acc_partial():
            rid = lax.broadcasted_iota(jnp.int32, weighted.shape, 0)
            ok = (row_start + rid) < rows_total
            acc_ref[...] += _fold(jnp.where(ok, weighted, 0.0))
    else:
        acc_ref[...] += _fold(weighted)

    @pl.when(j == blocks_per_split - 1)
    def _finalize():
        # Single cross-lane/sublane reduction per split, written to this
        # split's private output slot (lane-dense full-tile store).
        out_ref[...] = jnp.zeros(out_ref.shape, jnp.float32) + jnp.sum(acc_ref[...])


def multitask_learning_loss(output, target, log_vars, intra_class_weights,
                            *, target_block_bytes=4 << 20, num_splits=2):
    """output/target: (N, C) (f32 or bf16); log_vars/intra_class_weights: (C,)."""
    N, C = output.shape
    total = N * C

    lv = log_vars.astype(jnp.float32)
    a_class = jnp.exp(-2.0 * lv)                                   # (C,)
    b_class = a_class * (intra_class_weights.astype(jnp.float32) - 1.0)

    # ---- choose layout: lane-dense slab (free reshape) or natural (N, C) ----
    L = (C * 128) // math.gcd(C, 128)          # lcm(C, 128)
    if total % L == 0 and L <= 4096:
        W, rows = L, total // L
        x2d = output.reshape(rows, W)          # contiguous reshape: no copy
        t2d = target.reshape(rows, W)
        reps = L // C
        a_row = jnp.tile(a_class, reps)
        b_row = jnp.tile(b_class, reps)
    else:
        # Zero-copy fallback: stream (N, C) as-is (block last dim == full dim).
        W, rows = C, N
        x2d, t2d = output, target
        a_row, b_row = a_class, b_class
    ab = jnp.stack([a_row, b_row]).reshape(2, W)

    # ---- tile sizing: ~target_block_bytes per streamed block, 16-row grain ----
    itemsize = max(jnp.dtype(output.dtype).itemsize,
                   jnp.dtype(target.dtype).itemsize)
    row_bytes = W * itemsize
    if rows <= 16 or rows * row_bytes <= target_block_bytes:
        tile_rows = rows                       # single exact block, no raggedness
    else:
        budget = max(16, (target_block_bytes // row_bytes) // 16 * 16)
        half16 = (-(-(-(-rows // 2)) // 16)) * 16   # ceil(ceil(rows/2)/16)*16
        tile_rows = max(16, min(budget, half16))

    nblocks = -(-rows // tile_rows)
    num_splits = max(1, min(num_splits, nblocks))
    bpc = -(-nblocks // num_splits)            # blocks per split
    any_partial = (num_splits * bpc * tile_rows) != rows
    acc_rows = 8 if tile_rows % 8 == 0 else tile_rows

    kernel = functools.partial(
        _mtl_sum_kernel, rows_total=rows, tile_rows=tile_rows,
        acc_rows=acc_rows, blocks_per_split=bpc, any_partial=any_partial)

    block_bytes = tile_rows * row_bytes
    stream_bytes = 4 * block_bytes             # 2 inputs x 2 pipeline buffers
    vmem_limit = int(min(56 << 20,
                         max(16 << 20, stream_bytes + stream_bytes // 2 + (8 << 20))))

    def x_map(c, j):
        # Clamp so every DMA stays in range; the clamped "duplicate" step (only
        # when num_splits*bpc > nblocks) is zeroed out by the in-kernel mask.
        return (jnp.minimum(c * bpc + j, nblocks - 1), 0)

    partials = pl.pallas_call(
        kernel,
        out_shape=jax.ShapeDtypeStruct((num_splits, 8, 128), jnp.float32),
        grid_spec=pltpu.PrefetchScalarGridSpec(
            num_scalar_prefetch=0,
            grid=(num_splits, bpc),
            in_specs=[
                pl.BlockSpec((2, W), lambda c, j: (0, 0)),           # A/B rows
                pl.BlockSpec((tile_rows, W), x_map),                 # logits
                pl.BlockSpec((tile_rows, W), x_map),                 # targets
            ],
            out_specs=pl.BlockSpec((1, 8, 128), lambda c, j: (c, 0, 0)),
            scratch_shapes=[pltpu.VMEM((acc_rows, W), jnp.float32)],
        ),
        compiler_params=pltpu.CompilerParams(
            dimension_semantics=("parallel", "arbitrary"),
            vmem_limit_bytes=vmem_limit),
    )(ab, x2d, t2d)

    weighted_sum = jnp.sum(partials[:, 0, 0])
    return weighted_sum * jnp.float32(1.0 / total) + jnp.sum(lv)


def _reference(output, target, log_vars, intra_class_weights):
    x = output.astype(jnp.float32)
    t = target.astype(jnp.float32)
    pw = intra_class_weights.astype(jnp.float32)[None, :]
    lw = 1.0 + (pw - 1.0) * t
    bce = (1.0 - t) * x + lw * (jnp.log1p(jnp.exp(-jnp.abs(x)))
                                + jnp.maximum(-x, 0.0))
    inter = jnp.exp(-2.0 * log_vars.astype(jnp.float32))[None, :]
    return jnp.mean(bce * inter) + jnp.sum(log_vars.astype(jnp.float32))


if __name__ == "__main__":
    key = jax.random.PRNGKey(0)
    ks = jax.random.split(key, 8)

    # 1) Exact module init (log_vars = 0, intra weights = 1); lane-dense path.
    N1, C1 = 32, 8
    x1 = jax.random.normal(ks[0], (N1, C1), dtype=jnp.float32)
    t1 = (jax.random.uniform(ks[1], (N1, C1)) > 0.5).astype(jnp.float32)
    lv1 = jnp.zeros((C1,), jnp.float32)
    iw1 = jnp.ones((C1,), jnp.float32)
    got1 = jax.block_until_ready(multitask_learning_loss(x1, t1, lv1, iw1))
    want1 = _reference(x1, t1, lv1, iw1)
    assert jnp.allclose(got1, want1, rtol=1e-5, atol=1e-5), (got1, want1)

    # 2) Odd C + non-trivial params; zero-copy natural (N, C) fallback path.
    N2, C2 = 100, 7
    x2 = jax.random.normal(ks[2], (N2, C2), dtype=jnp.float32)
    t2 = (jax.random.uniform(ks[3], (N2, C2)) > 0.5).astype(jnp.float32)
    lv2 = 0.1 * jax.random.normal(ks[4], (C2,), dtype=jnp.float32)
    iw2 = jnp.abs(jax.random.normal(ks[5], (C2,), dtype=jnp.float32)) + 0.5
    got2 = jax.block_until_ready(multitask_learning_loss(x2, t2, lv2, iw2))
    want2 = _reference(x2, t2, lv2, iw2)
    assert jnp.allclose(got2, want2, rtol=1e-5, atol=1e-5), (got2, want2)

    # 3) Multi-block grid + 2-way split + ragged last block + clamped dup step.
    N3, C3 = 2032, 8
    x3 = jax.random.normal(ks[6], (N3, C3), dtype=jnp.float32)
    t3 = (jax.random.uniform(ks[7], (N3, C3)) > 0.5).astype(jnp.float32)
    lv3 = 0.05 * jax.random.normal(ks[4], (C3,), dtype=jnp.float32)
    iw3 = jnp.abs(jax.random.normal(ks[5], (C3,), dtype=jnp.float32)) + 0.5
    got3 = jax.block_until_ready(
        multitask_learning_loss(x3, t3, lv3, iw3, target_block_bytes=24 * 1024))
    want3 = _reference(x3, t3, lv3, iw3)
    assert jnp.allclose(got3, want3, rtol=1e-5, atol=1e-5), (got3, want3)

    # 4) bf16 logits/targets (kernel upcasts; halves HBM traffic).
    N4, C4 = 512, 8
    x4 = jax.random.normal(ks[0], (N4, C4), dtype=jnp.float32).astype(jnp.bfloat16)
    t4 = (jax.random.uniform(ks[1], (N4, C4)) > 0.5).astype(jnp.bfloat16)
    got4 = jax.block_until_ready(multitask_learning_loss(x4, t4, lv3, iw3))
    want4 = _reference(x4, t4, lv3, iw3)
    assert jnp.allclose(got4, want4, rtol=1e-4, atol=1e-5), (got4, want4)

    print("KERNEL_OK")
</pallas_src>

<mosaic_0001>
module attributes {stable_mosaic.version = 11 : i64} {
  func.func @_mtl_sum_kernel(%arg0: i32, %arg1: i32, %arg2: memref<2x128xf32, #tpu.memory_space<vmem>>, %arg3: memref<2x128xf32, #tpu.memory_space<vmem>>, %arg4: memref<2x128xf32, #tpu.memory_space<vmem>>, %arg5: memref<1x8x128xf32, #tpu.memory_space<vmem>>, %arg6: memref<2x128xf32, #tpu.memory_space<vmem>>) attributes {dimension_semantics = [#tpu.dimension_semantics<parallel>, #tpu.dimension_semantics<arbitrary>], iteration_bounds = array<i64: 1, 1>, scalar_prefetch = 0 : i64, scratch_operands = 1 : i64, tpu.core_type = #tpu.core_type<tc>, window_params = [{pipeline_mode = #tpu.pipeline_mode<synchronous>, transform_indices = @transform_0, window_bounds = array<i64: 2, 128>}, {transform_indices = @transform_1, window_bounds = array<i64: 2, 128>}, {transform_indices = @transform_2, window_bounds = array<i64: 2, 128>}, {transform_indices = @transform_3, window_bounds = array<i64: 1, 8, 128>}]} {
    %c0_i32 = arith.constant 0 : i32
    %0 = arith.cmpi eq, %arg1, %c0_i32 : i32
    %1 = arith.extui %0 : i1 to i32
    %c0_i32_0 = arith.constant 0 : i32
    %2 = arith.cmpi ne, %1, %c0_i32_0 : i32
    scf.if %2 {
      %cst_15 = arith.constant 0.000000e+00 : f32
      %35 = vector.broadcast %cst_15 : f32 to vector<2x128xf32>
      %c0_16 = arith.constant 0 : index
      %c0_17 = arith.constant 0 : index
      %36 = vector.load %arg6[%c0_16, %c0_17] : memref<2x128xf32, #tpu.memory_space<vmem>>, vector<2x128xf32>
      tpu.vector_store %arg6[%c0_16, %c0_17], %35 {strides = array<i32>} : memref<2x128xf32, #tpu.memory_space<vmem>>, vector<2x128xf32>,
    } else {
    }
    %c0 = arith.constant 0 : index
    %c0_1 = arith.constant 0 : index
    %3 = vector.load %arg3[%c0, %c0_1] : memref<2x128xf32, #tpu.memory_space<vmem>>, vector<2x128xf32>
    %c0_2 = arith.constant 0 : index
    %c0_3 = arith.constant 0 : index
    %4 = vector.load %arg4[%c0_2, %c0_3] : memref<2x128xf32, #tpu.memory_space<vmem>>, vector<2x128xf32>
    %c0_4 = arith.constant 0 : index
    %c0_5 = arith.constant 0 : index
    %5 = vector.load %arg2[%c0_4, %c0_5] : memref<2x128xf32, #tpu.memory_space<vmem>>, vector<2x128xf32>
    %6 = vector.extract_strided_slice %5 {offsets = [0, 0], sizes = [1, 128], strides = [1, 1]} : vector<2x128xf32> to vector<1x128xf32>
    %7 = vector.extract_strided_slice %5 {offsets = [1, 0], sizes = [1, 128], strides = [1, 1]} : vector<2x128xf32> to vector<1x128xf32>
    %8 = math.absf %3 : vector<2x128xf32>
    %cst = arith.constant 0.000000e+00 : f32
    %9 = vector.broadcast %cst : f32 to vector<2x128xf32>
    %10 = arith.subf %9, %8 : vector<2x128xf32>
    %11 = math.exp %10 : vector<2x128xf32>
    %12 = math.log1p %11 : vector<2x128xf32>
    %cst_6 = arith.constant 0.000000e+00 : f32
    %13 = vector.broadcast %cst_6 : f32 to vector<2x128xf32>
    %14 = arith.subf %13, %3 : vector<2x128xf32>
    %cst_7 = arith.constant 0.000000e+00 : f32
    %15 = vector.broadcast %cst_7 : f32 to vector<2x128xf32>
    %16 = arith.maximumf %14, %15 : vector<2x128xf32>
    %17 = arith.addf %12, %16 : vector<2x128xf32>
    %cst_8 = arith.constant 1.000000e+00 : f32
    %18 = vector.broadcast %cst_8 : f32 to vector<2x128xf32>
    %19 = arith.subf %18, %4 : vector<2x128xf32>
    %20 = vector.broadcast %6 : vector<1x128xf32> to vector<2x128xf32>
    %21 = arith.mulf %20, %19 : vector<2x128xf32>
    %22 = arith.mulf %21, %3 : vector<2x128xf32>
    %23 = vector.broadcast %7 : vector<1x128xf32> to vector<2x128xf32>
    %24 = arith.mulf %23, %4 : vector<2x128xf32>
    %25 = vector.broadcast %6 : vector<1x128xf32> to vector<2x128xf32>
    %26 = arith.addf %25, %24 : vector<2x128xf32>
    %27 = arith.mulf %26, %17 : vector<2x128xf32>
    %28 = arith.addf %22, %27 : vector<2x128xf32>
    %c0_9 = arith.constant 0 : index
    %c0_10 = arith.constant 0 : index
    %29 = vector.load %arg6[%c0_9, %c0_10] : memref<2x128xf32, #tpu.memory_space<vmem>>, vector<2x128xf32>
    %30 = arith.addf %29, %28 : vector<2x128xf32>
    %c0_11 = arith.constant 0 : index
    %c0_12 = arith.constant 0 : index
    %31 = vector.load %arg6[%c0_11, %c0_12] : memref<2x128xf32, #tpu.memory_space<vmem>>, vector<2x128xf32>
    tpu.vector_store %arg6[%c0_11, %c0_12], %30 {strides = array<i32>} : memref<2x128xf32, #tpu.memory_space<vmem>>, vector<2x128xf32>,
    %c0_i32_13 = arith.constant 0 : i32
    %32 = arith.cmpi eq, %arg1, %c0_i32_13 : i32
    %33 = arith.extui %32 : i1 to i32
    %c0_i32_14 = arith.constant 0 : i32
    %34 = arith.cmpi ne, %33, %c0_i32_14 : i32
    scf.if %34 {
      %cst_15 = arith.constant 0.000000e+00 : f32
      %35 = vector.broadcast %cst_15 : f32 to vector<1x8x128xf32>
      %c0_16 = arith.constant 0 : index
      %c0_17 = arith.constant 0 : index
      %36 = vector.load %arg6[%c0_16, %c0_17] : memref<2x128xf32, #tpu.memory_space<vmem>>, vector<2x128xf32>
      %37 = vector.shape_cast %36 : vector<2x128xf32> to vector<1x2x128xf32>
      %cst_18 = arith.constant dense<0.000000e+00> : vector<1xf32>
      %38 = vector.multi_reduction <add>, %37, %cst_18 [1, 2] : vector<1x2x128xf32> to vector<1xf32>
      %39 = vector.shape_cast %38 : vector<1xf32> to vector<1x1x1xf32>
      %40 = vector.extract %39[0, 0, 0] : f32 from vector<1x1x1xf32>
      %41 = vector.broadcast %40 : f32 to vector<1x8x128xf32>
      %42 = arith.addf %35, %41 : vector<1x8x128xf32>
      %c0_19 = arith.constant 0 : index
      %c0_20 = arith.constant 0 : index
      %c0_21 = arith.constant 0 : index
      %43 = vector.load %arg5[%c0_19, %c0_20, %c0_21] : memref<1x8x128xf32, #tpu.memory_space<vmem>>, vector<1x8x128xf32>
      tpu.vector_store %arg5[%c0_19, %c0_20, %c0_21], %42 {strides = array<i32>} : memref<1x8x128xf32, #tpu.memory_space<vmem>>, vector<1x8x128xf32>,
    } else {
    }
    return
  }
  func.func @transform_0(%arg0: i32, %arg1: i32) -> (i32, i32) {
    %c0_i32 = arith.constant 0 : i32
    %c0_i32_0 = arith.constant 0 : i32
    %c0_i32_1 = arith.constant 0 : i32
    return %c0_i32, %c0_i32_0 : i32, i32
  }
  func.func @transform_1(%arg0: i32, %arg1: i32) -> (i32, i32) {
    %c1_i32 = arith.constant 1 : i32
    %0 = arith.muli %arg0, %c1_i32 : i32
    %1 = arith.addi %0, %arg1 : i32
    %c0_i32 = arith.constant 0 : i32
    %2 = arith.minsi %1, %c0_i32 : i32
    %c0_i32_0 = arith.constant 0 : i32
    %c0_i32_1 = arith.constant 0 : i32
    return %2, %c0_i32_0 : i32, i32
  }
  func.func @transform_2(%arg0: i32, %arg1: i32) -> (i32, i32) {
    %c1_i32 = arith.constant 1 : i32
    %0 = arith.muli %arg0, %c1_i32 : i32
    %1 = arith.addi %0, %arg1 : i32
    %c0_i32 = arith.constant 0 : i32
    %2 = arith.minsi %1, %c0_i32 : i32
    %c0_i32_0 = arith.constant 0 : i32
    %c0_i32_1 = arith.constant 0 : i32
    return %2, %c0_i32_0 : i32, i32
  }
  func.func @transform_3(%arg0: i32, %arg1: i32) -> (i32, i32, i32) {
    %c0_i32 = arith.constant 0 : i32
    %c0_i32_0 = arith.constant 0 : i32
    %c0_i32_1 = arith.constant 0 : i32
    return %arg0, %c0_i32, %c0_i32_0 : i32, i32, i32
  }
}

</mosaic_0001>

<llo_original>
// kernel: tpu_custom_call.1
$region0: #{tpu_custom_call.1}
  #allocation0 [shape = 'u32[]', space=smem, size = 0x4, offset = 0x4, fixed_abs, tag = 'smem constant byte address 0x4 - core index']
  #allocation1 [shape = 'u32[144,128]{1,0:T(1,128)}', space=vmem, size = 0x12000, scoped, tag = 'internal scratch']
  #allocation2 [shape = 'f32[2,128]{1,0:T(2,128)}', space=vmem, size = 0x400, scoped, tag = 'scratch operand']
  %s0 = inlined_call_operand.hbm [shape: f32[2,128], index: 0, kind: input, shape index: {}]
  %s1 = inlined_call_operand.vmem [shape: f32[2,128], index: 1, kind: input, shape index: {}]
  %s2 = inlined_call_operand.vmem [shape: f32[2,128], index: 2, kind: input, shape index: {}]
  %s3 = inlined_call_operand.hbm [shape: f32[1,8,128], index: 3, kind: output, shape index: {}]
  %s4 = sld [smem:[#allocation0]]
  $region34: #{tpu_custom_call.1} parent=0
    _
  %s6 = ssub.s32 1, %s4
  %s7 = scalar_select 0, %s6, %s4
  $region1: #{tpu_custom_call.1} parent=0
    #allocation3 [shape = 'u8[1024]{0}', space=vmem, size = 0x400, scoped, tag = 'input window, operand 0, single buffered']
    #allocation4 [shape = 's32[1]{0}', space=sflag, size = 0x4, scoped, tag = 'scoped memory for tpu_custom_call.1']
    #allocation5 [shape = 's32[1]{0}', space=sflag, size = 0x4, scoped, tag = 'scoped memory for tpu_custom_call.1']
    #allocation6 [shape = 'u8[4096]{0}', space=vmem, size = 0x1000, scoped, tag = 'output window, operand 0, single buffered']
    %8 = vsyncpa [#allocation4], 0
    %9 = vsyncpa [#allocation5], 0
    // Predicated region
    $region2: #{tpu_custom_call.1} parent=1 // pred_check
      _
    $region3: #{tpu_custom_call.1} parent=1 // pred_check_branch
      %11 = sbr.rel (0) target = $region5
    $region4: #{tpu_custom_call.1} parent=1 // pred_region
      %s13 = ssub.s32 32, 32
      %14 = vsyncadd [#allocation4], %s13
      %s16 = sshll.u32 [#allocation3], 4
      %s17 = int_to_ptr.vmem [resolvable:$true] %s16
      %19 = dma.hbm_to_vmem [thread:$0]  %s0, 32, %s17, [#allocation4]
    $region5: #{tpu_custom_call.1} parent=1 // pred_fallthru
      _
    // Predicated region
    $region6: #{tpu_custom_call.1} parent=1 // pred_check
      _
    $region7: #{tpu_custom_call.1} parent=1 // pred_check_branch
      %21 = sbr.rel (0) target = $region9
    $region8: #{tpu_custom_call.1} parent=1 // pred_region
      %s22 = sadd.s32 0, 0
      %p23 = scmp.lt.s32.totalorder %s22, 0
      %s24 = scalar_select %p23, %s22, 0
      %p25 = scmp.lt.s32.totalorder %s24, 0
      %s26 = scalar_select %p25, %s24, 0
      %s27 = smul.addr %s26, 2
      %s28 = scalar_lea.vmem %s1, %s27
      %s29 = sadd.s32 0, 0
      %p30 = scmp.lt.s32.totalorder %s29, 0
      %s31 = scalar_select %p30, %s29, 0
    $region9: #{tpu_custom_call.1} parent=1 // pred_fallthru
      _
    // Predicated region
    $region10: #{tpu_custom_call.1} parent=1 // pred_check
      _
    $region11: #{tpu_custom_call.1} parent=1 // pred_check_branch
      %33 = sbr.rel (0) target = $region13
    $region12: #{tpu_custom_call.1} parent=1 // pred_region
      %s34 = sadd.s32 0, 0
      %p35 = scmp.lt.s32.totalorder %s34, 0
      %s36 = scalar_select %p35, %s34, 0
      %p37 = scmp.lt.s32.totalorder %s36, 0
      %s38 = scalar_select %p37, %s36, 0
      %s39 = smul.addr %s38, 2
      %s40 = scalar_lea.vmem %s2, %s39
      %s41 = sadd.s32 0, 0
      %p42 = scmp.lt.s32.totalorder %s41, 0
      %s43 = scalar_select %p42, %s41, 0
    $region13: #{tpu_custom_call.1} parent=1 // pred_fallthru
      _
    // Predicated region
    $region14: #{tpu_custom_call.1} parent=1 // pred_check
      _
    $region15: #{tpu_custom_call.1} parent=1 // pred_check_branch
      %45 = sbr.rel (0) target = $region17
    $region16: #{tpu_custom_call.1} parent=1 // pred_region
      %46 = dma.done [#allocation4], 32
    $region17: #{tpu_custom_call.1} parent=1 // pred_fallthru
      _
    %s47 = sadd.s32 0, 0
    %p48 = scmp.lt.s32.totalorder %s47, 0
    %s49 = scalar_select %p48, %s47, 0
    %p50 = scmp.lt.s32.totalorder %s49, 0
    %s51 = scalar_select %p50, %s49, 0
    %s52 = smul.addr %s51, 2
    %s53 = scalar_lea.vmem %s1, %s52
    %s54 = sadd.s32 0, 0
    %p55 = scmp.lt.s32.totalorder %s54, 0
    %s56 = scalar_select %p55, %s54, 0
    %p57 = scmp.lt.s32.totalorder %s56, 0
    %s58 = scalar_select %p57, %s56, 0
    %s59 = smul.addr %s58, 2
    %s60 = scalar_lea.vmem %s2, %s59
    %s61 = sadd.s32 0, 0
    %p62 = scmp.lt.s32.totalorder %s61, 0
    %s63 = scalar_select %p62, %s61, 0
    %p64 = scmp.lt.s32.totalorder %s63, 0
    %s65 = scalar_select %p64, %s63, 0
    %s66 = smul.addr %s65, 2
    %s67 = scalar_lea.vmem %s1, %s66
    %s68 = sadd.s32 0, 0
    %p69 = scmp.lt.s32.totalorder %s68, 0
    %s70 = scalar_select %p69, %s68, 0
    %s71 = sadd.s32 0, 0
    %p72 = scmp.lt.s32.totalorder %s71, 0
    %s73 = scalar_select %p72, %s71, 0
    %p74 = scmp.lt.s32.totalorder %s73, 0
    %s75 = scalar_select %p74, %s73, 0
    %s76 = smul.addr %s75, 2
    %s77 = scalar_lea.vmem %s2, %s76
    %s78 = sadd.s32 0, 0
    %p79 = scmp.lt.s32.totalorder %s78, 0
    %s80 = scalar_select %p79, %s78, 0
    %p81 = scmp.eq.s32.totalorder 0, 0
    // Predicated region
    $region18: #{tpu_custom_call.1} parent=1 // pred_check
      %p82 = pneg %p81
    $region19: #{tpu_custom_call.1} parent=1 // pred_check_branch
      %84 = sbr.rel (%p82) target = $region21
    $region20: #{tpu_custom_call.1} parent=1 // pred_region
      %85 = vst [vmem:[#allocation2] sm:$0x3] 0.0
    $region21: #{tpu_custom_call.1} parent=1 // pred_fallthru
      _
    %v86 = vld [vmem:[%s67] sm:$0x3]
    %v87 = vld [vmem:[%s77] sm:$0x3]
    %v88 = vld [vmem:[#allocation3] sm:$0x3]
    %v89 = vand.u32 2147483647, %v86
    %v90 = vsub.f32 0.0, %v89
    %v91 = vmul.f32 %v90, 1.442695
    %v92 = vpow.pop %v91
    %v93 = vadd.f32 %v92, 1.0
    %v94 = vlog2.pop %v93
    %v95 = vmul.f32 %v94, 0.6931472
    %v96 = vmul.f32 -0.5, %v92
    %v97 = vadd.f32 %v96, 1.0
    %v98 = vmul.f32 %v97, %v92
    %v99 = vand.u32 2147483647, %v92
    %vm100 = vcmp.lt.f32.partialorder %v99, 0.0004427343
    %v101 = vsel %vm100, %v98, %v95
    %v102 = vsub.f32 0.0, %v86
    %v103 = vmax.f32 %v102, 0.0
    %v104 = vadd.f32 %v101, %v103
    %v105 = vsub.f32 1.0, %v87
    %v106 = vlaneseq
    %v107 = vshrl.u32 %v106, 7
    %v108 = vsub.s32 0, %v107
    %v109 = vrot.slane %v88, %v108
    %v110 = vmul.f32 %v109, %v105
    %v111 = vmul.f32 %v110, %v86
    %v112 = vlaneseq
    %v113 = vshrl.u32 %v112, 7
    %v114 = vsub.s32 1, %v113
    %v115 = vrot.slane %v88, %v114
    %v116 = vmul.f32 %v115, %v87
    %v117 = vadd.f32 %v109, %v116
    %v118 = vmul.f32 %v117, %v104
    %v119 = vadd.f32 %v111, %v118
    %v120 = vld [vmem:[#allocation2] sm:$0x3]
    %v121 = vadd.f32 %v120, %v119
    %122 = vst [vmem:[#allocation2] sm:$0x3] %v121
    // Predicated region
    $region22: #{tpu_custom_call.1} parent=1 // pred_check
      %p123 = pneg %p81
    $region23: #{tpu_custom_call.1} parent=1 // pred_check_branch
      %125 = sbr.rel (%p123) target = $region25
    $region24: #{tpu_custom_call.1} parent=1 // pred_region
      %v126 = vld [vmem:[#allocation2] sm:$0x3]
      %vm127 = vcmask 1041408
      %v128 = vsel %vm127, %v126, 0.0
      %129 = vadd.xlane.f32.xlu0 %v128
      %v130 = vpop.xlane.xlu0 %129
      %v131 = vrot.slane %v130, 4
      %v132 = vadd.f32 %v130, %v131
      %v133 = vrot.slane %v132, 2
      %v134 = vadd.f32 %v132, %v133
      %v135 = vrot.slane %v134, 1
      %v136 = vadd.f32 %v134, %v135
      %s137 = vtos %v136
      %v138 = vstv %s137
      %v139 = vadd.f32 %v138, 0.0
      %140 = vst [vmem:[#allocation6] sm:$0xff] %v139
    $region25: #{tpu_custom_call.1} parent=1 // pred_fallthru
      _
    // Predicated region
    $region26: #{tpu_custom_call.1} parent=1 // pred_check
      _
    $region27: #{tpu_custom_call.1} parent=1 // pred_check_branch
      %142 = sbr.rel (0) target = $region29
    $region28: #{tpu_custom_call.1} parent=1 // pred_region
      %s144 = ssub.s32 128, 128
      %145 = vsyncadd [#allocation5], %s144
      %s147 = sshll.u32 [#allocation6], 4
      %s148 = int_to_ptr.vmem [resolvable:$true] %s147
      %150 = dma.vmem_to_hbm [thread:$0]  %s148, 128, %s3, [#allocation5]
    $region29: #{tpu_custom_call.1} parent=1 // pred_fallthru
      _
    // Predicated region
    $region30: #{tpu_custom_call.1} parent=1 // pred_check
      _
    $region31: #{tpu_custom_call.1} parent=1 // pred_check_branch
      %152 = sbr.rel (0) target = $region33
    $region32: #{tpu_custom_call.1} parent=1 // pred_region
      %153 = dma.done [#allocation5], 128
    $region33: #{tpu_custom_call.1} parent=1 // pred_fallthru
      _
    %154 = vsyncpa [#allocation4], 1
    %155 = vsyncpa [#allocation5], 1

</llo_original>
